<compile_context>
chip_gen: v7x
topology: tpu7x:2x2x1
jax: 0.10.0
libtpu: 0.0.40
codegen_flags: <defaults>
</compile_context>

<pallas_src>
import jax
import jax.numpy as jnp
from jax.experimental import pallas as pl
from jax.experimental.pallas import tpu as pltpu


def _focal_weight(one_minus_pt, gamma: float):
    """(1 - pt) ** gamma, with integer gamma lowered to VPU multiplies."""
    if gamma == 0.0:
        return jnp.ones_like(one_minus_pt)
    if float(gamma).is_integer() and 0.0 < gamma <= 8.0:
        w = one_minus_pt
        for _ in range(int(gamma) - 1):
            w = w * one_minus_pt
        return w
    return one_minus_pt ** gamma  # non-integer gamma: fall back to pow


def _make_focal_kernel(gamma: float):
    def focal_kernel(x_ref, t_ref, alpha_ref, loss_ref):
        x = x_ref[0].astype(jnp.float32)       # (C, T) logits: classes x spatial
        c, t_len = x.shape
        tgt = t_ref[0]                         # (1, T) int32 targets (lane-dense)

        # log-softmax over the class axis (small C on sublanes, T on lanes)
        m = jnp.max(x, axis=0, keepdims=True)                       # (1, T)
        z = x - m                                                   # (C, T)
        lse = jnp.log(jnp.sum(jnp.exp(z), axis=0, keepdims=True))   # (1, T)

        # One-hot gather of target logit and alpha in a single pass; the full
        # log-prob matrix (z - lse) is never materialized.
        cls = jax.lax.broadcasted_iota(jnp.int32, (c, t_len), 0)
        onehot = cls == tgt                                         # (C, T)
        z_t = jnp.sum(jnp.where(onehot, z, 0.0), axis=0, keepdims=True)          # (1, T)
        at = jnp.sum(jnp.where(onehot, alpha_ref[...], 0.0), axis=0, keepdims=True)  # (1, T)

        logpt = z_t - lse                      # (1, T) log p_t
        pt = jnp.exp(logpt)
        logpt_a = logpt * at
        # Clamp: exp(logpt) can round marginally above 1.0 -> keep base >= 0.
        one_minus_pt = jnp.maximum(1.0 - pt, 0.0)

        loss_ref[0] = -_focal_weight(one_minus_pt, gamma) * logpt_a  # (1, T)

    return focal_kernel


def _canon_alpha(alpha, c):
    """Replicate the PyTorch constructor's alpha handling; returns (C, 1) f32."""
    if alpha is None:
        return jnp.ones((c, 1), jnp.float32)   # neutral weighting
    if isinstance(alpha, (float, int)):
        vals = jnp.asarray([float(alpha), 1.0 - float(alpha)], jnp.float32)
    else:
        vals = jnp.asarray(alpha, jnp.float32).reshape(-1)
    assert vals.shape[0] == c, "alpha must have one entry per class"
    return vals.reshape(c, 1)


def _pick_spatial_tile(hw: int, c: int, budget_bytes: int = 8 * 1024 * 1024) -> int:
    """Largest 128-aligned divisor of H*W whose double-buffered tiles fit VMEM."""
    for t in (8192, 4096, 2048, 1024, 512, 256, 128):
        if hw % t == 0 and 2 * (c + 2) * t * 4 <= budget_bytes:
            return t
    # TODO(synk): tail-tile masking for spatial sizes with no 128-aligned
    # divisor; for now fall back to the full (block == array dim) extent.
    return hw


def focal_loss_pallas(logits_nchw, target_nhw, gamma=2.0, alpha=None,
                      size_average=True):
    """Forward of FocalLoss. logits_nchw: (N, C, H, W) float; target_nhw: (N, H, W) int."""
    n, c, h, w = logits_nchw.shape
    hw = h * w

    # Free, contiguous reshapes — no transpose, no extra HBM copy.
    x3 = logits_nchw.reshape(n, c, hw)                    # (N, C, HW)
    t3 = target_nhw.reshape(n, 1, hw).astype(jnp.int32)   # (N, 1, HW)
    alpha_c1 = _canon_alpha(alpha, c)                     # (C, 1)

    t_hw = _pick_spatial_tile(hw, c)
    assert hw % t_hw == 0
    grid = (n, hw // t_hw)

    loss_map = pl.pallas_call(
        _make_focal_kernel(float(gamma)),
        out_shape=jax.ShapeDtypeStruct((n, 1, hw), jnp.float32),
        grid_spec=pltpu.PrefetchScalarGridSpec(
            num_scalar_prefetch=0,
            grid=grid,
            in_specs=[
                pl.BlockSpec((1, c, t_hw), lambda i, j: (i, 0, j)),   # logits tile
                pl.BlockSpec((1, 1, t_hw), lambda i, j: (i, 0, j)),   # targets tile
                pl.BlockSpec((c, 1), lambda i, j: (0, 0)),            # alpha (resident)
            ],
            out_specs=pl.BlockSpec((1, 1, t_hw), lambda i, j: (i, 0, j)),
        ),
        compiler_params=pltpu.CompilerParams(
            # Independent output blocks per grid point -> fully parallel
            # (lets v7x shard the grid across both TensorCores).
            dimension_semantics=("parallel", "parallel"),
            vmem_limit_bytes=48 * 1024 * 1024,
        ),
    )(x3, t3, alpha_c1)

    total = jnp.sum(loss_map)          # single cheap reduction in the wrapper
    if size_average:
        return total / jnp.float32(n * hw)
    return total


def focal_loss_ref(logits_nchw, target_nhw, gamma=2.0, alpha=None,
                   size_average=True):
    n, c, h, w = logits_nchw.shape
    x = jnp.transpose(logits_nchw, (0, 2, 3, 1)).reshape(-1, c)
    t = target_nhw.reshape(-1).astype(jnp.int32)
    logp = jax.nn.log_softmax(x, axis=1)
    logpt = jnp.take_along_axis(logp, t[:, None], axis=1)[:, 0]
    pt = jnp.exp(logpt)
    if alpha is not None:
        if isinstance(alpha, (float, int)):
            a = jnp.asarray([float(alpha), 1.0 - float(alpha)], jnp.float32)
        else:
            a = jnp.asarray(alpha, jnp.float32)
        logpt = logpt * a[t]
    loss = -1.0 * (1.0 - pt) ** gamma * logpt
    return loss.mean() if size_average else loss.sum()


if __name__ == "__main__":
    key = jax.random.PRNGKey(0)
    k1, k2 = jax.random.split(key)

    N, C, H, W = 2, 4, 16, 16          # M = N*H*W = 512 elements
    gamma = 2.0
    alpha = [0.1, 0.2, 0.3, 0.4]       # per-class alpha (len == C)

    logits = jax.random.normal(k1, (N, C, H, W), jnp.float32)
    target = jax.random.randint(k2, (N, H, W), 0, C, jnp.int32)

    out = focal_loss_pallas(logits, target, gamma=gamma, alpha=alpha,
                            size_average=True)
    out = jax.block_until_ready(out)

    ref = focal_loss_ref(logits, target, gamma=gamma, alpha=alpha,
                         size_average=True)
    assert jnp.allclose(out, ref, rtol=1e-5, atol=1e-5), (out, ref)

    print("KERNEL_OK")
</pallas_src>

<mosaic_0001>
module attributes {stable_mosaic.version = 11 : i64} {
  func.func @focal_kernel(%arg0: i32, %arg1: i32, %arg2: memref<1x4x256xf32, #tpu.memory_space<vmem>>, %arg3: memref<1x1x256xi32, #tpu.memory_space<vmem>>, %arg4: memref<4x1xf32, #tpu.memory_space<vmem>>, %arg5: memref<1x1x256xf32, #tpu.memory_space<vmem>>) attributes {dimension_semantics = [#tpu.dimension_semantics<parallel>, #tpu.dimension_semantics<parallel>], iteration_bounds = array<i64: 2, 1>, scalar_prefetch = 0 : i64, scratch_operands = 0 : i64, tpu.core_type = #tpu.core_type<tc>, window_params = [{transform_indices = @transform_0, window_bounds = array<i64: 1, 4, 256>}, {transform_indices = @transform_1, window_bounds = array<i64: 1, 1, 256>}, {pipeline_mode = #tpu.pipeline_mode<synchronous>, transform_indices = @transform_2, window_bounds = array<i64: 4, 1>}, {transform_indices = @transform_3, window_bounds = array<i64: 1, 1, 256>}]} {
    %c0 = arith.constant 0 : index
    %c0_0 = arith.constant 0 : index
    %c0_1 = arith.constant 0 : index
    %0 = vector.load %arg2[%c0, %c0_0, %c0_1] : memref<1x4x256xf32, #tpu.memory_space<vmem>>, vector<1x4x256xf32>
    %1 = vector.shape_cast %0 : vector<1x4x256xf32> to vector<4x256xf32>
    %c0_2 = arith.constant 0 : index
    %c0_3 = arith.constant 0 : index
    %c0_4 = arith.constant 0 : index
    %2 = vector.load %arg3[%c0_2, %c0_3, %c0_4] : memref<1x1x256xi32, #tpu.memory_space<vmem>>, vector<1x1x256xi32>
    %3 = vector.shape_cast %2 : vector<1x1x256xi32> to vector<1x256xi32>
    %cst = arith.constant dense<0xFF800000> : vector<256xf32>
    %4 = vector.multi_reduction <maximumf>, %1, %cst [0] : vector<4x256xf32> to vector<256xf32>
    %5 = vector.shape_cast %4 : vector<256xf32> to vector<1x256xf32>
    %6 = vector.broadcast %5 : vector<1x256xf32> to vector<4x256xf32>
    %7 = arith.subf %1, %6 : vector<4x256xf32>
    %8 = math.exp %7 : vector<4x256xf32>
    %cst_5 = arith.constant dense<0.000000e+00> : vector<256xf32>
    %9 = vector.multi_reduction <add>, %8, %cst_5 [0] : vector<4x256xf32> to vector<256xf32>
    %10 = vector.shape_cast %9 : vector<256xf32> to vector<1x256xf32>
    %11 = math.log %10 : vector<1x256xf32>
    %12 = tpu.iota {dimensions = array<i32: 0>} : vector<4x256xi32>
    %13 = vector.broadcast %3 : vector<1x256xi32> to vector<4x256xi32>
    %14 = arith.cmpi eq, %12, %13 : vector<4x256xi32>
    %cst_6 = arith.constant 0.000000e+00 : f32
    %15 = vector.broadcast %cst_6 : f32 to vector<4x256xf32>
    %16 = arith.select %14, %7, %15 : vector<4x256xi1>, vector<4x256xf32>
    %cst_7 = arith.constant dense<0.000000e+00> : vector<256xf32>
    %17 = vector.multi_reduction <add>, %16, %cst_7 [0] : vector<4x256xf32> to vector<256xf32>
    %18 = vector.shape_cast %17 : vector<256xf32> to vector<1x256xf32>
    %c0_8 = arith.constant 0 : index
    %c0_9 = arith.constant 0 : index
    %19 = vector.load %arg4[%c0_8, %c0_9] : memref<4x1xf32, #tpu.memory_space<vmem>>, vector<4x1xf32>
    %cst_10 = arith.constant 0.000000e+00 : f32
    %20 = vector.shape_cast %19 : vector<4x1xf32> to vector<4x1xf32>
    %21 = vector.broadcast %20 : vector<4x1xf32> to vector<4x256xf32>
    %22 = vector.broadcast %cst_10 : f32 to vector<4x256xf32>
    %23 = arith.select %14, %21, %22 : vector<4x256xi1>, vector<4x256xf32>
    %cst_11 = arith.constant dense<0.000000e+00> : vector<256xf32>
    %24 = vector.multi_reduction <add>, %23, %cst_11 [0] : vector<4x256xf32> to vector<256xf32>
    %25 = vector.shape_cast %24 : vector<256xf32> to vector<1x256xf32>
    %26 = arith.subf %18, %11 : vector<1x256xf32>
    %27 = math.exp %26 : vector<1x256xf32>
    %28 = arith.mulf %26, %25 : vector<1x256xf32>
    %cst_12 = arith.constant 1.000000e+00 : f32
    %29 = vector.broadcast %cst_12 : f32 to vector<1x256xf32>
    %30 = arith.subf %29, %27 : vector<1x256xf32>
    %cst_13 = arith.constant 0.000000e+00 : f32
    %31 = vector.broadcast %cst_13 : f32 to vector<1x256xf32>
    %32 = arith.maximumf %30, %31 : vector<1x256xf32>
    %33 = arith.mulf %32, %32 : vector<1x256xf32>
    %cst_14 = arith.constant 0.000000e+00 : f32
    %34 = vector.broadcast %cst_14 : f32 to vector<1x256xf32>
    %35 = arith.subf %34, %33 : vector<1x256xf32>
    %36 = arith.mulf %35, %28 : vector<1x256xf32>
    %c0_15 = arith.constant 0 : index
    %c0_16 = arith.constant 0 : index
    %c0_17 = arith.constant 0 : index
    %37 = vector.load %arg5[%c0_15, %c0_16, %c0_17] : memref<1x1x256xf32, #tpu.memory_space<vmem>>, vector<1x1x256xf32>
    %38 = vector.shape_cast %37 : vector<1x1x256xf32> to vector<1x256xf32>
    %39 = vector.shape_cast %36 : vector<1x256xf32> to vector<1x1x256xf32>
    tpu.vector_store %arg5[%c0_15, %c0_16, %c0_17], %39 {strides = array<i32>} : memref<1x1x256xf32, #tpu.memory_space<vmem>>, vector<1x1x256xf32>,
    return
  }
  func.func @transform_0(%arg0: i32, %arg1: i32) -> (i32, i32, i32) {
    %c0_i32 = arith.constant 0 : i32
    %c0_i32_0 = arith.constant 0 : i32
    return %arg0, %c0_i32, %arg1 : i32, i32, i32
  }
  func.func @transform_1(%arg0: i32, %arg1: i32) -> (i32, i32, i32) {
    %c0_i32 = arith.constant 0 : i32
    %c0_i32_0 = arith.constant 0 : i32
    return %arg0, %c0_i32, %arg1 : i32, i32, i32
  }
  func.func @transform_2(%arg0: i32, %arg1: i32) -> (i32, i32) {
    %c0_i32 = arith.constant 0 : i32
    %c0_i32_0 = arith.constant 0 : i32
    %c0_i32_1 = arith.constant 0 : i32
    return %c0_i32, %c0_i32_0 : i32, i32
  }
  func.func @transform_3(%arg0: i32, %arg1: i32) -> (i32, i32, i32) {
    %c0_i32 = arith.constant 0 : i32
    %c0_i32_0 = arith.constant 0 : i32
    return %arg0, %c0_i32, %arg1 : i32, i32, i32
  }
}

</mosaic_0001>

<llo_original>
// kernel: tpu_custom_call.1
$region0: #{tpu_custom_call.1}
  #allocation0 [shape = 'u32[]', space=smem, size = 0x4, offset = 0x4, fixed_abs, tag = 'smem constant byte address 0x4 - core index']
  #allocation1 [shape = 'u32[144,128]{1,0:T(1,128)}', space=vmem, size = 0x12000, scoped, tag = 'internal scratch']
  %s0 = inlined_call_operand.hbm [shape: f32[2,4,256], index: 0, kind: input, shape index: {}]
  %s1 = inlined_call_operand.vmem [shape: s32[2,1,256], index: 1, kind: input, shape index: {}]
  %s2 = inlined_call_operand.vmem [shape: f32[4,1], index: 2, kind: input, shape index: {}]
  %s3 = inlined_call_operand.hbm [shape: f32[2,1,256], index: 3, kind: output, shape index: {}]
  %s4 = sld [smem:[#allocation0]]
  $region49: #{tpu_custom_call.1} parent=0
    _
  %s6 = ssub.s32 1, %s4
  %s7 = scalar_select 0, %s6, %s4
  $region1: #{tpu_custom_call.1} parent=0
    #allocation2 [shape = 'u8[8192]{0}', space=vmem, size = 0x2000, scoped, tag = 'input window, operand 0']
    #allocation3 [shape = 's32[2]{0}', space=sflag, size = 0x8, scoped, tag = 'scoped memory for tpu_custom_call.1']
    #allocation4 [shape = 's32[2]{0}', space=sflag, size = 0x8, scoped, tag = 'scoped memory for tpu_custom_call.1']
    #allocation5 [shape = 'u8[2048]{0}', space=vmem, size = 0x800, scoped, tag = 'output window, operand 0']
    %8 = vsyncpa [#allocation3], 0
    %s9 = scalar_lea.sflag [#allocation3], 1
    %10 = vsyncpa %s9, 0
    %11 = vsyncpa [#allocation4], 0
    %s12 = scalar_lea.sflag [#allocation4], 1
    %13 = vsyncpa %s12, 0
    loop: start=0, step=1, limit=4
    $region2: #{tpu_custom_call.1} parent=1 // loop_pre_header
      _
    $region3: #{tpu_custom_call.1} parent=1 // loop_header
      %s15 = sphi 0, %s19
      %p16 = scmp.ge.s32.totalorder %s15, 4
      %s22 = sphi 0, %s34
      %s23 = sphi 0, %s30
      %s24 = sphi 0, %s22
      %s25 = sphi 0, %s23
      %s26 = sphi 0, %s24
      %s27 = sphi 0, %s25
      %s39 = sphi 0, %s41
      %s42 = sphi 0, %s39
      %s43 = sphi 0, %s42
      %s59 = sphi 0, %s43
      %s67 = sphi 0, %s69
      %s70 = sphi 0, %s67
      %s71 = sphi 0, %s70
      %s87 = sphi 0, %s71
      %s91 = sphi 0, %s91
      %s93 = sphi 0, %s91
      %s94 = sphi 0, %s93
      %s108 = sphi 0, %s94
      %s116 = sphi 0, %s118
      %s119 = sphi 0, %s116
      %s120 = sphi 0, %s119
      %s136 = sphi 0, %s120
    $region4: #{tpu_custom_call.1} parent=1 // loop_header_branch
      %18 = sbr.rel (%p16) target = $region8
    $region5: #{tpu_custom_call.1} parent=1 // loop_body
      %s20 = ssub.s32 %s15, 1
      %s21 = ssub.s32 %s15, 2
      %s28 = sadd.s32 1, %s23
      %p29 = scmp.ge.s32.totalorder %s28, 1
      %s30 = scalar_select %p29, 0, %s28
      %s31 = sadd.s32 1, %s22
      %s32 = scalar_select %p29, %s31, %s22
      %p33 = scmp.ge.s32.totalorder %s32, 2
      %s34 = scalar_select %p33, 0, %s32
      %s35 = ssub.s32 %s22, %s34
      %s36 = ssub.s32 %s23, %s30
      %s37 = sor.u32 %s35, %s36
      %p38 = scmp.eq.s32.totalorder %s37, 0
      %s40 = sadd.s32 %s39, 1
      %s41 = scalar_select %p38, %s39, %s40
      %p44 = pneg %p38
      %p45 = scmp.eq.s32.totalorder %s15, 1
      %p46 = por %p44, %p45
      %p47 = scmp.ne.s32.totalorder %s39, %s42
      %p48 = scmp.eq.s32.totalorder %s15, 0
      %p49 = por %p47, %p48
      %p50 = scmp.ne.s32.totalorder %s39, %s42
      %p51 = scmp.eq.s32.totalorder %s20, 1
      %p52 = por %p50, %p51
      %p53 = scmp.ne.s32.totalorder %s42, %s43
      %p54 = scmp.eq.s32.totalorder %s20, 0
      %p55 = por %p53, %p54
      %p56 = scmp.ne.s32.totalorder %s42, %s43
      %p57 = scmp.eq.s32.totalorder %s21, 1
      %p58 = por %p56, %p57
      %p60 = scmp.ne.s32.totalorder %s43, %s59
      %p61 = scmp.eq.s32.totalorder %s21, 0
      %p62 = por %p60, %p61
      %s63 = ssub.s32 %s22, %s34
      %s64 = ssub.s32 %s23, %s30
      %s65 = sor.u32 %s63, %s64
      %p66 = scmp.eq.s32.totalorder %s65, 0
      %s68 = sadd.s32 %s67, 1
      %s69 = scalar_select %p66, %s67, %s68
      %p72 = pneg %p66
      %p73 = scmp.eq.s32.totalorder %s15, 1
      %p74 = por %p72, %p73
      %p75 = scmp.ne.s32.totalorder %s67, %s70
      %p76 = scmp.eq.s32.totalorder %s15, 0
      %p77 = por %p75, %p76
      %p78 = scmp.ne.s32.totalorder %s67, %s70
      %p79 = scmp.eq.s32.totalorder %s20, 1
      %p80 = por %p78, %p79
      %p81 = scmp.ne.s32.totalorder %s70, %s71
      %p82 = scmp.eq.s32.totalorder %s20, 0
      %p83 = por %p81, %p82
      %p84 = scmp.ne.s32.totalorder %s70, %s71
      %p85 = scmp.eq.s32.totalorder %s21, 1
      %p86 = por %p84, %p85
      %p88 = scmp.ne.s32.totalorder %s71, %s87
      %p89 = scmp.eq.s32.totalorder %s21, 0
      %p90 = por %p88, %p89
      %s92 = sadd.s32 %s91, 1
      %p95 = scmp.eq.s32.totalorder %s15, 1
      %p96 = scmp.ne.s32.totalorder %s91, %s93
      %p97 = scmp.eq.s32.totalorder %s15, 0
      %p98 = por %p96, %p97
      %p99 = scmp.ne.s32.totalorder %s91, %s93
      %p100 = scmp.eq.s32.totalorder %s20, 1
      %p101 = por %p99, %p100
      %p102 = scmp.ne.s32.totalorder %s93, %s94
      %p103 = scmp.eq.s32.totalorder %s20, 0
      %p104 = por %p102, %p103
      %p105 = scmp.ne.s32.totalorder %s93, %s94
      %p106 = scmp.eq.s32.totalorder %s21, 1
      %p107 = por %p105, %p106
      %p109 = scmp.ne.s32.totalorder %s94, %s108
      %p110 = scmp.eq.s32.totalorder %s21, 0
      %p111 = por %p109, %p110
      %s112 = ssub.s32 %s22, %s34
      %s113 = ssub.s32 %s23, %s30
      %s114 = sor.u32 %s112, %s113
      %p115 = scmp.eq.s32.totalorder %s114, 0
      %s117 = sadd.s32 %s116, 1
      %s118 = scalar_select %p115, %s116, %s117
      %p121 = pneg %p115
      %p122 = scmp.eq.s32.totalorder %s15, 1
      %p123 = por %p121, %p122
      %p124 = scmp.ne.s32.totalorder %s116, %s119
      %p125 = scmp.eq.s32.totalorder %s15, 0
      %p126 = por %p124, %p125
      %p127 = scmp.ne.s32.totalorder %s116, %s119
      %p128 = scmp.eq.s32.totalorder %s20, 1
      %p129 = por %p127, %p128
      %p130 = scmp.ne.s32.totalorder %s119, %s120
      %p131 = scmp.eq.s32.totalorder %s20, 0
      %p132 = por %p130, %p131
      %p133 = scmp.ne.s32.totalorder %s119, %s120
      %p134 = scmp.eq.s32.totalorder %s21, 1
      %p135 = por %p133, %p134
      %p137 = scmp.ne.s32.totalorder %s120, %s136
      %p138 = scmp.eq.s32.totalorder %s21, 0
      %p139 = por %p137, %p138
      %p140 = scmp.le.s32.totalorder 1, %s15
      %p141 = scmp.lt.s32.totalorder %s15, 3
      %p142 = pnand %p140, %p141
      %p143 = pneg %p142
      // Predicated region
      $region9: #{tpu_custom_call.1} parent=5 // pred_check
        _
      $region10: #{tpu_custom_call.1} parent=5 // pred_check_branch
        %145 = sbr.rel (%p142) target = $region12
      $region11: #{tpu_custom_call.1} parent=5 // pred_region
        %s146 = ssub.s32 %s15, 1
        // Predicated region
        $region13: #{tpu_custom_call.1} parent=11 // pred_check
          %p147 = pneg %p104
        $region14: #{tpu_custom_call.1} parent=11 // pred_check_branch
          %149 = sbr.rel (%p147) target = $region16
        $region15: #{tpu_custom_call.1} parent=11 // pred_region
          _
        $region16: #{tpu_custom_call.1} parent=11 // pred_fallthru
          _
      $region12: #{tpu_custom_call.1} parent=5 // pred_fallthru
        _
      %p150 = scmp.lt.s32.totalorder %s15, 2
      // Predicated region
      $region17: #{tpu_custom_call.1} parent=5 // pred_check
        %p151 = pneg %p150
      $region18: #{tpu_custom_call.1} parent=5 // pred_check_branch
        %153 = sbr.rel (%p151) target = $region20
      $region19: #{tpu_custom_call.1} parent=5 // pred_region
        // Predicated region
        $region21: #{tpu_custom_call.1} parent=19 // pred_check
          %p154 = pneg %p49
        $region22: #{tpu_custom_call.1} parent=19 // pred_check_branch
          %156 = sbr.rel (%p154) target = $region24
        $region23: #{tpu_custom_call.1} parent=19 // pred_region
          %s157 = sand.u32 %s39, 1
          %s158 = scalar_lea.sflag [#allocation3], %s157
          %s159 = sand.u32 %s39, 1
          %s160 = smul.addr %s159, 8
          %s161 = scalar_lea.vmem [#allocation2], %s160
          %s162 = smul.u32 2, %s23
          %s164 = ssub.s32 128, 128
          %165 = vsyncadd %s158, %s164
          %s166 = smul.addr %s22, 2
          %s167 = sadd.s32 %s162, %s166
          %s168 = smul.addr %s167, 64
          %s169 = scalar_lea.hbm %s0, %s168
          %s171 = sshll.u32 %s161, 4
          %s172 = int_to_ptr.vmem [resolvable:$true] %s171
          %174 = dma.hbm_to_vmem [thread:$0]  %s169, 128, %s172, %s158
        $region24: #{tpu_custom_call.1} parent=19 // pred_fallthru
          _
        // Predicated region
        $region25: #{tpu_custom_call.1} parent=19 // pred_check
          %p175 = pneg %p77
        $region26: #{tpu_custom_call.1} parent=19 // pred_check_branch
          %177 = sbr.rel (%p175) target = $region28
        $region27: #{tpu_custom_call.1} parent=19 // pred_region
          %s178 = smul.u32 2, %s23
          %p179 = scmp.lt.s32.totalorder %s22, 1
          %s180 = scalar_select %p179, %s22, 1
          %p181 = scmp.lt.s32.totalorder %s178, 1
          %s182 = scalar_select %p181, %s178, 1
          %s183 = smul.addr %s180, 2
          %s184 = sadd.s32 %s182, %s183
          %s185 = scalar_lea.vmem %s1, %s184
          %s186 = smul.u32 2, %s23
        $region28: #{tpu_custom_call.1} parent=19 // pred_fallthru
          _
      $region20: #{tpu_custom_call.1} parent=5 // pred_fallthru
        _
      %p187 = scmp.le.s32.totalorder 1, %s15
      %p188 = scmp.lt.s32.totalorder %s15, 3
      %p189 = pnand %p187, %p188
      %p190 = pneg %p189
      // Predicated region
      $region29: #{tpu_custom_call.1} parent=5 // pred_check
        _
      $region30: #{tpu_custom_call.1} parent=5 // pred_check_branch
        %192 = sbr.rel (%p189) target = $region32
      $region31: #{tpu_custom_call.1} parent=5 // pred_region
        %s193 = ssub.s32 %s15, 1
        %s194 = sand.u32 %s42, 1
        %s195 = scalar_lea.sflag [#allocation3], %s194
        %s196 = sand.u32 %s42, 1
        %s197 = smul.addr %s196, 8
        %s198 = scalar_lea.vmem [#allocation2], %s197
        // Predicated region
        $region33: #{tpu_custom_call.1} parent=31 // pred_check
          %p199 = pneg %p55
        $region34: #{tpu_custom_call.1} parent=31 // pred_check_branch
          %201 = sbr.rel (%p199) target = $region36
        $region35: #{tpu_custom_call.1} parent=31 // pred_region
          %202 = dma.done %s195, 128
        $region36: #{tpu_custom_call.1} parent=31 // pred_fallthru
          _
        %s203 = sand.u32 %s42, 1
        %s204 = scalar_lea.sflag [#allocation3], %s203
        %s205 = sand.u32 %s42, 1
        %s206 = smul.addr %s205, 8
        %s207 = scalar_lea.vmem [#allocation2], %s206
        %p208 = pneg %p55
        %p209 = pneg %p52
        %s210 = smul.u32 2, %s25
        %p211 = scmp.lt.s32.totalorder %s24, 1
        %s212 = scalar_select %p211, %s24, 1
        %p213 = scmp.lt.s32.totalorder %s210, 1
        %s214 = scalar_select %p213, %s210, 1
        %s215 = smul.addr %s212, 2
        %s216 = sadd.s32 %s214, %s215
        %s217 = scalar_lea.vmem %s1, %s216
        %p218 = pneg %p83
        %p219 = pneg %p80
        %p220 = pneg %p104
        %p221 = pneg %p101
        %p222 = pneg %p132
        %p223 = pneg %p129
        %s224 = sand.u32 %s119, 1
        %s225 = scalar_lea.sflag [#allocation4], %s224
        %s226 = sand.u32 %s119, 1
        %s227 = smul.addr %s226, 2
        %s228 = scalar_lea.vmem [#allocation5], %s227
        %s229 = smul.u32 2, %s25
        %s230 = smul.u32 2, %s25
        %p231 = scmp.lt.s32.totalorder %s24, 1
        %s232 = scalar_select %p231, %s24, 1
        %p233 = scmp.lt.s32.totalorder %s230, 1
        %s234 = scalar_select %p233, %s230, 1
        %s235 = smul.addr %s232, 2
        %s236 = sadd.s32 %s234, %s235
        %s237 = scalar_lea.vmem %s1, %s236
        %s238 = smul.u32 2, %s25
        %s239 = smul.u32 2, %s25
        %v240 = vld [vmem:[%s198] sm:$0xff]
        %v241 = vld [vmem:[%s237] sm:$0x3]
        %v243 = vcombine.high %v240, %v240
        %vm245 = vcmask 1043456
        %v246 = vsel %vm245, %v240, -inf
        %v247 = vrot.slane %v246, 4
        %v248 = vmax.f32 %v246, %v247
        %v249 = vrot.slane %v248, 2
        %v250 = vmax.f32 %v248, %v249
        %v251 = vrot.slane %v250, 1
        %v252 = vmax.f32 %v250, %v251
        %v253 = vsel %vm245, %v243, -inf
        %v254 = vrot.slane %v253, 4
        %v255 = vmax.f32 %v253, %v254
        %v256 = vrot.slane %v255, 2
        %v257 = vmax.f32 %v255, %v256
        %v258 = vrot.slane %v257, 1
        %v259 = vmax.f32 %v257, %v258
        %v262 = vcombine.low %v252, %v259
        %v264 = vsub.f32 %v240, %v262
        %v265 = vmul.f32 %v264, 1.442695
        %v266 = vpow.pop %v265
        %v268 = vcombine.high %v266, %v266
        %v270 = vsel %vm245, %v266, 0.0
        %v271 = vrot.slane %v270, 4
        %v272 = vadd.f32 %v270, %v271
        %v273 = vrot.slane %v272, 2
        %v274 = vadd.f32 %v272, %v273
        %v275 = vrot.slane %v274, 1
        %v276 = vadd.f32 %v274, %v275
        %v277 = vsel %vm245, %v268, 0.0
        %v278 = vrot.slane %v277, 4
        %v279 = vadd.f32 %v277, %v278
        %v280 = vrot.slane %v279, 2
        %v281 = vadd.f32 %v279, %v280
        %v282 = vrot.slane %v281, 1
        %v283 = vadd.f32 %v281, %v282
        %v284 = vlog2.pop %v276
        %v285 = vmul.f32 %v284, 0.6931472
        %v286 = vlog2.pop %v283
        %v287 = vmul.f32 %v286, 0.6931472
        %v288 = vlaneseq
        %v289 = vshrl.u32 %v288, 7
        %v290 = vlaneseq
        %v291 = vshrl.u32 %v290, 7
        %v292 = vsub.s32 0, %v291
        %v293 = vrot.slane %v241, %v292
        %v294 = vlaneseq
        %v295 = vshrl.u32 %v294, 7
        %v296 = vsub.s32 1, %v295
        %v297 = vrot.slane %v241, %v296
        %vm298 = vcmp.eq.s32.totalorder %v289, %v293
        %vm299 = vcmp.eq.s32.totalorder %v289, %v297
        %v301 = vcombine.high %v264, %v264
        %v303 = vsel %vm298, %v264, 0.0
        %v304 = vsel %vm299, %v301, 0.0
        %v305 = vsel %vm245, %v303, 0.0
        %v306 = vrot.slane %v305, 4
        %v307 = vadd.f32 %v305, %v306
        %v308 = vrot.slane %v307, 2
        %v309 = vadd.f32 %v307, %v308
        %v310 = vrot.slane %v309, 1
        %v311 = vadd.f32 %v309, %v310
        %v312 = vsel %vm245, %v304, 0.0
        %v313 = vrot.slane %v312, 4
        %v314 = vadd.f32 %v312, %v313
        %v315 = vrot.slane %v314, 2
        %v316 = vadd.f32 %v314, %v315
        %v317 = vrot.slane %v316, 1
        %v318 = vadd.f32 %v316, %v317
        %v319 = vld [vmem:[%s2] sm:$0xf]
        %321 = vset.pattern.permute.xlu0 0
        %322 = vperm.xlu0 %321, %v319
        %v323 = vpop.permute.xlu0 %322
        %v325 = vsel %vm298, %v323, 0.0
        %v326 = vsel %vm299, %v323, 0.0
        %v327 = vsel %vm245, %v325, 0.0
        %v328 = vrot.slane %v327, 4
        %v329 = vadd.f32 %v327, %v328
        %v330 = vrot.slane %v329, 2
        %v331 = vadd.f32 %v329, %v330
        %v332 = vrot.slane %v331, 1
        %v333 = vadd.f32 %v331, %v332
        %v334 = vsel %vm245, %v326, 0.0
        %v335 = vrot.slane %v334, 4
        %v336 = vadd.f32 %v334, %v335
        %v337 = vrot.slane %v336, 2
        %v338 = vadd.f32 %v336, %v337
        %v339 = vrot.slane %v338, 1
        %v340 = vadd.f32 %v338, %v339
        %v341 = vsub.f32 %v311, %v285
        %v342 = vsub.f32 %v318, %v287
        %v343 = vmul.f32 %v341, 1.442695
        %v344 = vpow.pop %v343
        %v345 = vmul.f32 %v342, 1.442695
        %v346 = vpow.pop %v345
        %v347 = vmul.f32 %v341, %v333
        %v348 = vmul.f32 %v342, %v340
        %v349 = vsub.f32 1.0, %v344
        %v350 = vsub.f32 1.0, %v346
        %v351 = vmax.f32 %v349, 0.0
        %v352 = vmax.f32 %v350, 0.0
        %v353 = vmul.f32 %v351, %v351
        %v354 = vmul.f32 %v352, %v352
        %v355 = vsub.f32 0.0, %v353
        %v356 = vsub.f32 0.0, %v354
        %v357 = vmul.f32 %v355, %v347
        %v358 = vmul.f32 %v356, %v348
        %v361 = vcombine.low %v357, %v358
        %v363 = vunpack.c.l.s4 1966171168
        %v364 = vunpack.c.0.s8 %v363
        %v365 = vlaneseq
        %v366 = vshrl.u32 %v365, 7
        %v367 = vsub.s32 %v364, %v366
        %v368 = vrot.slane %v361, %v367
        %v370 = vunpack.c.l.s4 1966171168
        %v371 = vunpack.c.0.s8 %v370
        %v372 = vlaneseq
        %v373 = vshrl.u32 %v372, 7
        %v374 = vsub.s32 %v371, %v373
        %v375 = vrot.slane %v368, %v374
        %v377 = vlaneseq
        %vm378 = vcmp.ge.s32.totalorder %v377, 0
        %vm379 = vcmp.lt.s32.totalorder %v377, 256
        %vm380 = vmand %vm378, %vm379
        %381 = vst.msk [vmem:[%s228] sm:$0x3] %vm380, %v375
        %s382 = sand.u32 %s119, 1
        %s383 = scalar_lea.sflag [#allocation4], %s382
        %s384 = sand.u32 %s119, 1
        %s385 = smul.addr %s384, 2
        %s386 = scalar_lea.vmem [#allocation5], %s385
        // Predicated region
        $region37: #{tpu_custom_call.1} parent=31 // pred_check
          %p387 = pneg %p129
        $region38: #{tpu_custom_call.1} parent=31 // pred_check_branch
          %389 = sbr.rel (%p387) target = $region40
        $region39: #{tpu_custom_call.1} parent=31 // pred_region
          %s390 = smul.u32 2, %s25
          %s392 = ssub.s32 32, 32
          %393 = vsyncadd %s383, %s392
          %s394 = smul.addr %s24, 2
          %s395 = sadd.s32 %s390, %s394
          %s396 = smul.addr %s395, 16
          %s397 = scalar_lea.hbm %s3, %s396
          %s399 = sshll.u32 %s386, 4
          %s400 = int_to_ptr.vmem [resolvable:$true] %s399
          %402 = dma.vmem_to_hbm [thread:$0]  %s400, 32, %s397, %s383
        $region40: #{tpu_custom_call.1} parent=31 // pred_fallthru
          _
      $region32: #{tpu_custom_call.1} parent=5 // pred_fallthru
        _
      %p403 = scmp.le.s32.totalorder 2, %s15
      // Predicated region
      $region41: #{tpu_custom_call.1} parent=5 // pred_check
        %p404 = pneg %p403
      $region42: #{tpu_custom_call.1} parent=5 // pred_check_branch
        %406 = sbr.rel (%p404) target = $region44
      $region43: #{tpu_custom_call.1} parent=5 // pred_region
        %s407 = ssub.s32 %s15, 2
        // Predicated region
        $region45: #{tpu_custom_call.1} parent=43 // pred_check
          %p408 = pneg %p135
        $region46: #{tpu_custom_call.1} parent=43 // pred_check_branch
          %410 = sbr.rel (%p408) target = $region48
        $region47: #{tpu_custom_call.1} parent=43 // pred_region
          %s411 = sand.u32 %s120, 1
          %s412 = scalar_lea.sflag [#allocation4], %s411
          %s413 = sand.u32 %s120, 1
          %s414 = smul.addr %s413, 2
          %s415 = scalar_lea.vmem [#allocation5], %s414
          %416 = dma.done %s412, 32
        $region48: #{tpu_custom_call.1} parent=43 // pred_fallthru
          _
      $region44: #{tpu_custom_call.1} parent=5 // pred_fallthru
        _
    $region6: #{tpu_custom_call.1} parent=1 // loop_footer
      %s19 = sadd.s32 1, %s15
    $region7: #{tpu_custom_call.1} parent=1 // loop_footer_branch
      %14 = sbr.rel target = $region3
    $region8: #{tpu_custom_call.1} parent=1 // loop_exit
      _
    %417 = vsyncpa [#allocation3], 1
    %s418 = scalar_lea.sflag [#allocation3], 1
    %419 = vsyncpa %s418, 1
    %420 = vsyncpa [#allocation4], 1
    %s421 = scalar_lea.sflag [#allocation4], 1
    %422 = vsyncpa %s421, 1

</llo_original>
